<compile_context>
chip_gen: v7x
topology: tpu7x:2x2x1
jax: 0.10.0
libtpu: 0.0.40
codegen_flags: <defaults>
</compile_context>

<pallas_src>
import jax
import jax.numpy as jnp
from jax.experimental import pallas as pl
from jax.experimental.pallas import tpu as pltpu


_MAX_TILE_BYTES = 4 * 1024 * 1024          # 4 MiB tile: ~86% of HBM roofline
_LANE_CANDIDATES = (1024, 512, 256, 128)   # lane-dense last dims (multiples of 128)


def _mul_add_kernel(x_ref, o_ref):
    # Elementwise hot path: y = x*2 + 3 (weak-typed consts keep input dtype).
    o_ref[...] = x_ref[...] * 2 + 3


def _round_up(n, m):
    return ((n + m - 1) // m) * m


def pt_module_forward(x):
    """y[i] = x[i] * 2 + 3 for every batch index i (stacked)."""
    orig_shape = x.shape
    total = x.size
    itemsize = jnp.dtype(x.dtype).itemsize

    # ---- pick a lane width that divides total -> zero pad/slice passes ----
    lanes = None
    for cand in _LANE_CANDIDATES:
        if total % cand == 0:
            lanes = cand
            break

    if lanes is None:
        # Rare ragged fallback: one pad + one slice (extra HBM pass).
        lanes = 128
        padded_total = _round_up(total, lanes)
        flat = jnp.pad(x.reshape(-1), (0, padded_total - total))
        needs_slice = True
    else:
        flat = x.reshape(-1)          # free: pure layout view for XLA
        needs_slice = False

    rows = flat.size // lanes
    x2d = flat.reshape(rows, lanes)

    # ---- row tiling ---------------------------------------------------------
    max_tile_rows = max(8, (_MAX_TILE_BYTES // (lanes * itemsize)) // 8 * 8)

    if rows <= max_tile_rows:
        if rows >= 16:
            # Split into (at least) 2 row-blocks so the "parallel" axis can
            # shard across the two TensorCores on v7x; neutral on v5e/v6e.
            tile_rows = _round_up(pl.cdiv(rows, 2), 8)
        else:
            tile_rows = rows          # full extent -> always a legal block
    else:
        tile_rows = max_tile_rows     # multiple of 8; ragged last block is masked

    grid = (pl.cdiv(rows, tile_rows),)

    # ---- explicit VMEM budget: 2 buffers x (in + out) x tile + headroom -----
    tile_bytes = tile_rows * lanes * itemsize
    vmem_limit = min(max(2 * 2 * tile_bytes + (8 << 20), 16 << 20), 48 << 20)

    cost = pl.CostEstimate(
        flops=2 * total,
        transcendentals=0,
        bytes_accessed=2 * total * itemsize,
    )

    y2d = pl.pallas_call(
        _mul_add_kernel,
        out_shape=jax.ShapeDtypeStruct((rows, lanes), x.dtype),
        grid=grid,
        in_specs=[pl.BlockSpec((tile_rows, lanes), lambda i: (i, 0))],
        out_specs=pl.BlockSpec((tile_rows, lanes), lambda i: (i, 0)),
        compiler_params=pltpu.CompilerParams(
            dimension_semantics=("parallel",),
            vmem_limit_bytes=vmem_limit,
        ),
        cost_estimate=cost,
    )(x2d)

    out = y2d.reshape(-1)
    if needs_slice:
        out = out[:total]
    return out.reshape(orig_shape)


if __name__ == "__main__":
    key = jax.random.PRNGKey(0)
    # Small shapes consistent with an NCHW image-like input.
    x = jax.random.normal(key, (2, 4, 16, 16), dtype=jnp.float32)

    y = pt_module_forward(x)
    y = jax.block_until_ready(y)

    # Reference check (plain JAX) — matches the PyTorch loop + stack semantics.
    y_ref = x * 2 + 3
    assert y.shape == x.shape
    assert jnp.allclose(y, y_ref, atol=1e-6), "mismatch vs reference"

    print("KERNEL_OK")
</pallas_src>

<mosaic_0001>
module attributes {stable_mosaic.version = 11 : i64} {
  func.func @_mul_add_kernel(%arg0: i32, %arg1: memref<2x1024xf32, #tpu.memory_space<vmem>>, %arg2: memref<2x1024xf32, #tpu.memory_space<vmem>>) attributes {dimension_semantics = [#tpu.dimension_semantics<parallel>], iteration_bounds = array<i64: 1>, scalar_prefetch = 0 : i64, scratch_operands = 0 : i64, tpu.core_type = #tpu.core_type<tc>, window_params = [{transform_indices = @transform_0, window_bounds = array<i64: 2, 1024>}, {transform_indices = @transform_1, window_bounds = array<i64: 2, 1024>}]} {
    %c0 = arith.constant 0 : index
    %c0_0 = arith.constant 0 : index
    %0 = vector.load %arg1[%c0, %c0_0] : memref<2x1024xf32, #tpu.memory_space<vmem>>, vector<2x1024xf32>
    %cst = arith.constant 2.000000e+00 : f32
    %1 = vector.broadcast %cst : f32 to vector<2x1024xf32>
    %2 = arith.mulf %0, %1 : vector<2x1024xf32>
    %cst_1 = arith.constant 3.000000e+00 : f32
    %3 = vector.broadcast %cst_1 : f32 to vector<2x1024xf32>
    %4 = arith.addf %2, %3 : vector<2x1024xf32>
    %c0_2 = arith.constant 0 : index
    %c0_3 = arith.constant 0 : index
    %5 = vector.load %arg2[%c0_2, %c0_3] : memref<2x1024xf32, #tpu.memory_space<vmem>>, vector<2x1024xf32>
    tpu.vector_store %arg2[%c0_2, %c0_3], %4 {strides = array<i32>} : memref<2x1024xf32, #tpu.memory_space<vmem>>, vector<2x1024xf32>,
    return
  }
  func.func @transform_0(%arg0: i32) -> (i32, i32) {
    %c0_i32 = arith.constant 0 : i32
    %c0_i32_0 = arith.constant 0 : i32
    return %arg0, %c0_i32 : i32, i32
  }
  func.func @transform_1(%arg0: i32) -> (i32, i32) {
    %c0_i32 = arith.constant 0 : i32
    %c0_i32_0 = arith.constant 0 : i32
    return %arg0, %c0_i32 : i32, i32
  }
}

</mosaic_0001>

<llo_original>
// kernel: tpu_custom_call.1
$region0: #{tpu_custom_call.1}
  #allocation0 [shape = 'u32[]', space=smem, size = 0x4, offset = 0x4, fixed_abs, tag = 'smem constant byte address 0x4 - core index']
  #allocation1 [shape = 'u32[144,128]{1,0:T(1,128)}', space=vmem, size = 0x12000, scoped, tag = 'internal scratch']
  %s0 = inlined_call_operand.hbm [shape: f32[2,1024], index: 0, kind: input, shape index: {}]
  %s1 = inlined_call_operand.hbm [shape: f32[2,1024], index: 1, kind: output, shape index: {}]
  %s2 = sld [smem:[#allocation0]]
  $region18: #{tpu_custom_call.1} parent=0
    _
  %s4 = ssub.s32 1, %s2
  %s5 = scalar_select 0, %s4, %s2
  $region1: #{tpu_custom_call.1} parent=0
    #allocation2 [shape = 'u8[8192]{0}', space=vmem, size = 0x2000, scoped, tag = 'input window, operand 0, single buffered']
    #allocation3 [shape = 's32[1]{0}', space=sflag, size = 0x4, scoped, tag = 'scoped memory for tpu_custom_call.1']
    #allocation4 [shape = 's32[1]{0}', space=sflag, size = 0x4, scoped, tag = 'scoped memory for tpu_custom_call.1']
    #allocation5 [shape = 'u8[8192]{0}', space=vmem, size = 0x2000, scoped, tag = 'output window, operand 0, single buffered']
    %6 = vsyncpa [#allocation3], 0
    %7 = vsyncpa [#allocation4], 0
    // Predicated region
    $region2: #{tpu_custom_call.1} parent=1 // pred_check
      _
    $region3: #{tpu_custom_call.1} parent=1 // pred_check_branch
      %9 = sbr.rel (0) target = $region5
    $region4: #{tpu_custom_call.1} parent=1 // pred_region
      %s11 = ssub.s32 256, 256
      %12 = vsyncadd [#allocation3], %s11
      %s14 = sshll.u32 [#allocation2], 4
      %s15 = int_to_ptr.vmem [resolvable:$true] %s14
      %17 = dma.hbm_to_vmem [thread:$0]  %s0, 256, %s15, [#allocation3]
    $region5: #{tpu_custom_call.1} parent=1 // pred_fallthru
      _
    // Predicated region
    $region6: #{tpu_custom_call.1} parent=1 // pred_check
      _
    $region7: #{tpu_custom_call.1} parent=1 // pred_check_branch
      %19 = sbr.rel (0) target = $region9
    $region8: #{tpu_custom_call.1} parent=1 // pred_region
      %20 = dma.done [#allocation3], 256
    $region9: #{tpu_custom_call.1} parent=1 // pred_fallthru
      _
    %v21 = vld [vmem:[#allocation2] sm:$0xff]
    %v22 = vld [vmem:[#allocation2 + $0x8] sm:$0xff]
    %v23 = vmul.f32 %v21, 2.0
    %v24 = vmul.f32 %v22, 2.0
    %v25 = vadd.f32 %v23, 3.0
    %v26 = vadd.f32 %v24, 3.0
    %27 = vst [vmem:[#allocation5] sm:$0xff] %v25
    %28 = vst [vmem:[#allocation5 + $0x8] sm:$0xff] %v26
    // Predicated region
    $region10: #{tpu_custom_call.1} parent=1 // pred_check
      _
    $region11: #{tpu_custom_call.1} parent=1 // pred_check_branch
      %30 = sbr.rel (0) target = $region13
    $region12: #{tpu_custom_call.1} parent=1 // pred_region
      %s32 = ssub.s32 256, 256
      %33 = vsyncadd [#allocation4], %s32
      %s35 = sshll.u32 [#allocation5], 4
      %s36 = int_to_ptr.vmem [resolvable:$true] %s35
      %38 = dma.vmem_to_hbm [thread:$0]  %s36, 256, %s1, [#allocation4]
    $region13: #{tpu_custom_call.1} parent=1 // pred_fallthru
      _
    // Predicated region
    $region14: #{tpu_custom_call.1} parent=1 // pred_check
      _
    $region15: #{tpu_custom_call.1} parent=1 // pred_check_branch
      %40 = sbr.rel (0) target = $region17
    $region16: #{tpu_custom_call.1} parent=1 // pred_region
      %41 = dma.done [#allocation4], 256
    $region17: #{tpu_custom_call.1} parent=1 // pred_fallthru
      _
    %42 = vsyncpa [#allocation3], 1
    %43 = vsyncpa [#allocation4], 1

</llo_original>
